<compile_context>
chip_gen: v7x
topology: tpu7x:2x2x1
jax: 0.10.0
libtpu: 0.0.40
codegen_flags: <defaults>
</compile_context>

<pallas_src>
import jax
import jax.numpy as jnp
from jax.experimental import pallas as pl
from jax.experimental.pallas import tpu as pltpu

EPS = 1e-5
NEG_SLOPE = 0.01  # F.leaky_relu default
D_IN = 101
D_IN_PAD = 128


def _leaky_relu(x):
    return jnp.where(x > 0, x, NEG_SLOPE * x)


def _batchnorm(x, gamma, beta, mean, var):
    inv = jax.lax.rsqrt(var + EPS)
    return (x - mean) * inv * gamma + beta


def _fold_bn(w, b, gamma, beta, mean, var):
    """Fold eval-mode BatchNorm1d into the preceding Linear (exact, in f32)."""
    scale = gamma * jax.lax.rsqrt(var + EPS)      # (1, out)
    w_f = w * scale                               # column-wise scale of (in, out)
    b_f = (b - mean) * scale + beta               # (1, out)
    return w_f, b_f


def _round_up(x, m):
    return ((x + m - 1) // m) * m


def simplenet_kernel(x_ref,
                     w1_ref, b1_ref,
                     w2_ref, b2_ref,
                     w3_ref, b3_ref,
                     w4_ref, b4_ref,
                     o_ref):
    # x: (TB, 128) bf16; weights bf16; biases f32; accumulate in f32 on MXU.
    x = x_ref[...]

    # fc1 (+folded BN1) -> leaky_relu     (dropout = identity in eval)
    h = jnp.dot(x, w1_ref[...], preferred_element_type=jnp.float32) + b1_ref[...]
    h = _leaky_relu(h)

    # fc2 (+folded BN2) -> leaky_relu
    h = jnp.dot(h.astype(jnp.bfloat16), w2_ref[...],
                preferred_element_type=jnp.float32) + b2_ref[...]
    h = _leaky_relu(h)

    # fc3 (+folded BN3) -> leaky_relu
    h = jnp.dot(h.astype(jnp.bfloat16), w3_ref[...],
                preferred_element_type=jnp.float32) + b3_ref[...]
    h = _leaky_relu(h)

    # fc4 (16 -> 1): VPU multiply + 16-lane reduction instead of N=1 MXU matmul
    y = jnp.sum(h * w4_ref[...], axis=-1, keepdims=True) + b4_ref[...]
    o_ref[...] = jax.nn.sigmoid(y)


def _pick_tile_b(B, max_tile=512):
    """Multiple-of-8 batch tile, preferring >= 2 grid steps (so the 'parallel'
    batch axis can shard across both v7x TensorCores), capped for VMEM."""
    if B <= 8:
        return 8
    t = _round_up(pl.cdiv(B, 2), 8)
    return min(t, max_tile)


def simplenet_forward(x, params, *, tile_b=None):
    B, d_in = x.shape
    assert d_in == D_IN

    (w1, b1, g1, be1, m1, v1,
     w2, b2, g2, be2, m2, v2,
     w3, b3, g3, be3, m3, v3,
     w4, b4) = params

    # --- fold BN into the Linears (f32, exact) ---
    w1f, b1f = _fold_bn(w1, b1, g1, be1, m1, v1)
    w2f, b2f = _fold_bn(w2, b2, g2, be2, m2, v2)
    w3f, b3f = _fold_bn(w3, b3, g3, be3, m3, v3)

    # --- batch tiling (pad B to a tile multiple; padded rows are sliced off) ---
    if tile_b is None:
        tile_b = _pick_tile_b(B)
    B_pad = _round_up(B, tile_b)
    grid = (B_pad // tile_b,)

    # --- pad K: 101 -> 128 and batch B -> B_pad (zeros; exact after slice) ---
    x_p = jnp.pad(x, ((0, B_pad - B), (0, D_IN_PAD - d_in)))
    w1p = jnp.pad(w1f, ((0, D_IN_PAD - d_in), (0, 0)))

    # --- bf16 matmul operands (accumulate in f32 inside the kernel) ---
    x_b = x_p.astype(jnp.bfloat16)
    w1b = w1p.astype(jnp.bfloat16)
    w2b = w2f.astype(jnp.bfloat16)
    w3b = w3f.astype(jnp.bfloat16)
    w4r = w4.reshape(1, 16).astype(jnp.float32)   # row vector for VPU path
    b4r = b4.reshape(1, 1).astype(jnp.float32)

    def const_spec(p):
        # Constant block index -> resident in VMEM across all grid steps.
        return pl.BlockSpec(p.shape, lambda i, _nd=p.ndim: (0,) * _nd)

    in_specs = [pl.BlockSpec((tile_b, D_IN_PAD), lambda i: (i, 0))]
    in_specs += [const_spec(p) for p in (w1b, b1f, w2b, b2f, w3b, b3f, w4r, b4r)]
    out_spec = pl.BlockSpec((tile_b, 1), lambda i: (i, 0))

    out = pl.pallas_call(
        simplenet_kernel,
        out_shape=jax.ShapeDtypeStruct((B_pad, 1), jnp.float32),
        grid_spec=pltpu.PrefetchScalarGridSpec(
            num_scalar_prefetch=0,
            grid=grid,
            in_specs=in_specs,
            out_specs=out_spec,
        ),
        compiler_params=pltpu.CompilerParams(
            dimension_semantics=("parallel",),
        ),
    )(x_b, w1b, b1f, w2b, b2f, w3b, b3f, w4r, b4r)

    return out[:B]


def init_params(key):
    """Deterministic parameter init. Linear weights are stored transposed
    (in, out). Biases / BN vectors are stored as (1, N)."""
    dims = [(101, 512), (512, 128), (128, 16), (16, 1)]
    keys = jax.random.split(key, 16)
    ki = iter(range(16))
    params = []
    for li, (fan_in, fan_out) in enumerate(dims):
        bound = 1.0 / jnp.sqrt(fan_in)
        w = jax.random.uniform(keys[next(ki)], (fan_in, fan_out),
                               jnp.float32, -bound, bound)
        b = jax.random.uniform(keys[next(ki)], (1, fan_out),
                               jnp.float32, -bound, bound)
        params += [w, b]
        if li < 3:  # batchnorm after fc1/fc2/fc3
            gamma = jax.random.uniform(keys[next(ki)], (1, fan_out),
                                       jnp.float32, 0.5, 1.5)
            beta = jax.random.uniform(keys[next(ki)], (1, fan_out),
                                      jnp.float32, -0.5, 0.5)
            mean = 0.1 * jnp.sin(jnp.arange(fan_out, dtype=jnp.float32)).reshape(1, fan_out)
            var = 1.0 + 0.1 * jnp.cos(jnp.arange(fan_out, dtype=jnp.float32)).reshape(1, fan_out)
            params += [gamma, beta, mean, var]
    return tuple(params)


def reference_forward(x, params):
    """Pure-JAX f32 reference (unfolded BN) for sanity checking."""
    (w1, b1, g1, be1, m1, v1,
     w2, b2, g2, be2, m2, v2,
     w3, b3, g3, be3, m3, v3,
     w4, b4) = params
    h = x @ w1 + b1
    h = _leaky_relu(_batchnorm(h, g1, be1, m1, v1))
    h = h @ w2 + b2
    h = _leaky_relu(_batchnorm(h, g2, be2, m2, v2))
    h = h @ w3 + b3
    h = _leaky_relu(_batchnorm(h, g3, be3, m3, v3))
    h = h @ w4 + b4
    return jax.nn.sigmoid(h)


if __name__ == "__main__":
    key = jax.random.PRNGKey(0)
    k_x, k_p = jax.random.split(key)

    B = 64
    x = jax.random.normal(k_x, (B, 101), dtype=jnp.float32)
    params = init_params(k_p)

    out = simplenet_forward(x, params)   # auto tile_b -> 32 (2 grid steps)
    out = jax.block_until_ready(out)

    ref = reference_forward(x, params)
    assert out.shape == (B, 1)
    # bf16 matmul operands -> loosened tolerance vs the f32 reference
    assert jnp.allclose(out, ref, atol=2e-2, rtol=2e-2), "mismatch vs reference"

    print("KERNEL_OK")
</pallas_src>

<mosaic_0001>
module attributes {stable_mosaic.version = 11 : i64} {
  func.func @simplenet_kernel(%arg0: i32, %arg1: memref<32x128xbf16, #tpu.memory_space<vmem>>, %arg2: memref<128x512xbf16, #tpu.memory_space<vmem>>, %arg3: memref<1x512xf32, #tpu.memory_space<vmem>>, %arg4: memref<512x128xbf16, #tpu.memory_space<vmem>>, %arg5: memref<1x128xf32, #tpu.memory_space<vmem>>, %arg6: memref<128x16xbf16, #tpu.memory_space<vmem>>, %arg7: memref<1x16xf32, #tpu.memory_space<vmem>>, %arg8: memref<1x16xf32, #tpu.memory_space<vmem>>, %arg9: memref<1x1xf32, #tpu.memory_space<vmem>>, %arg10: memref<32x1xf32, #tpu.memory_space<vmem>>) attributes {dimension_semantics = [#tpu.dimension_semantics<parallel>], iteration_bounds = array<i64: 2>, scalar_prefetch = 0 : i64, scratch_operands = 0 : i64, tpu.core_type = #tpu.core_type<tc>, window_params = [{transform_indices = @transform_0, window_bounds = array<i64: 32, 128>}, {pipeline_mode = #tpu.pipeline_mode<synchronous>, transform_indices = @transform_1, window_bounds = array<i64: 128, 512>}, {pipeline_mode = #tpu.pipeline_mode<synchronous>, transform_indices = @transform_2, window_bounds = array<i64: 1, 512>}, {pipeline_mode = #tpu.pipeline_mode<synchronous>, transform_indices = @transform_3, window_bounds = array<i64: 512, 128>}, {pipeline_mode = #tpu.pipeline_mode<synchronous>, transform_indices = @transform_4, window_bounds = array<i64: 1, 128>}, {pipeline_mode = #tpu.pipeline_mode<synchronous>, transform_indices = @transform_5, window_bounds = array<i64: 128, 16>}, {pipeline_mode = #tpu.pipeline_mode<synchronous>, transform_indices = @transform_6, window_bounds = array<i64: 1, 16>}, {pipeline_mode = #tpu.pipeline_mode<synchronous>, transform_indices = @transform_7, window_bounds = array<i64: 1, 16>}, {pipeline_mode = #tpu.pipeline_mode<synchronous>, transform_indices = @transform_8, window_bounds = array<i64: 1, 1>}, {transform_indices = @transform_9, window_bounds = array<i64: 32, 1>}]} {
    %c0 = arith.constant 0 : index
    %c0_0 = arith.constant 0 : index
    %0 = vector.load %arg1[%c0, %c0_0] : memref<32x128xbf16, #tpu.memory_space<vmem>>, vector<32x128xbf16>
    %c0_1 = arith.constant 0 : index
    %c0_2 = arith.constant 0 : index
    %1 = vector.load %arg2[%c0_1, %c0_2] : memref<128x512xbf16, #tpu.memory_space<vmem>>, vector<128x512xbf16>
    %cst = arith.constant dense<0.000000e+00> : vector<32x512xf32>
    %2 = tpu.matmul %0, %1, %cst {dimension_numbers = #tpu.dot_dimension_numbers<[1], [0], [0], [1], [0, 0, 1, 1], [], []>} : vector<32x128xbf16>, vector<128x512xbf16>, vector<32x512xf32> -> vector<32x512xf32>
    %c0_3 = arith.constant 0 : index
    %c0_4 = arith.constant 0 : index
    %3 = vector.load %arg3[%c0_3, %c0_4] : memref<1x512xf32, #tpu.memory_space<vmem>>, vector<1x512xf32>
    %4 = vector.broadcast %3 : vector<1x512xf32> to vector<32x512xf32>
    %5 = arith.addf %2, %4 : vector<32x512xf32>
    %cst_5 = arith.constant 0.000000e+00 : f32
    %6 = vector.broadcast %cst_5 : f32 to vector<32x512xf32>
    %7 = arith.cmpf ogt, %5, %6 : vector<32x512xf32>
    %cst_6 = arith.constant 0.00999999977 : f32
    %8 = vector.broadcast %cst_6 : f32 to vector<32x512xf32>
    %9 = arith.mulf %8, %5 : vector<32x512xf32>
    %10 = arith.select %7, %5, %9 : vector<32x512xi1>, vector<32x512xf32>
    %11 = arith.truncf %10 : vector<32x512xf32> to vector<32x512xbf16>
    %c0_7 = arith.constant 0 : index
    %c0_8 = arith.constant 0 : index
    %12 = vector.load %arg4[%c0_7, %c0_8] : memref<512x128xbf16, #tpu.memory_space<vmem>>, vector<512x128xbf16>
    %cst_9 = arith.constant dense<0.000000e+00> : vector<32x128xf32>
    %13 = tpu.matmul %11, %12, %cst_9 {dimension_numbers = #tpu.dot_dimension_numbers<[1], [0], [0], [1], [0, 0, 1, 1], [], []>} : vector<32x512xbf16>, vector<512x128xbf16>, vector<32x128xf32> -> vector<32x128xf32>
    %c0_10 = arith.constant 0 : index
    %c0_11 = arith.constant 0 : index
    %14 = vector.load %arg5[%c0_10, %c0_11] : memref<1x128xf32, #tpu.memory_space<vmem>>, vector<1x128xf32>
    %15 = vector.broadcast %14 : vector<1x128xf32> to vector<32x128xf32>
    %16 = arith.addf %13, %15 : vector<32x128xf32>
    %cst_12 = arith.constant 0.000000e+00 : f32
    %17 = vector.broadcast %cst_12 : f32 to vector<32x128xf32>
    %18 = arith.cmpf ogt, %16, %17 : vector<32x128xf32>
    %cst_13 = arith.constant 0.00999999977 : f32
    %19 = vector.broadcast %cst_13 : f32 to vector<32x128xf32>
    %20 = arith.mulf %19, %16 : vector<32x128xf32>
    %21 = arith.select %18, %16, %20 : vector<32x128xi1>, vector<32x128xf32>
    %22 = arith.truncf %21 : vector<32x128xf32> to vector<32x128xbf16>
    %c0_14 = arith.constant 0 : index
    %c0_15 = arith.constant 0 : index
    %23 = vector.load %arg6[%c0_14, %c0_15] : memref<128x16xbf16, #tpu.memory_space<vmem>>, vector<128x16xbf16>
    %cst_16 = arith.constant dense<0.000000e+00> : vector<32x16xf32>
    %24 = tpu.matmul %22, %23, %cst_16 {dimension_numbers = #tpu.dot_dimension_numbers<[1], [0], [0], [1], [0, 0, 1, 1], [], []>} : vector<32x128xbf16>, vector<128x16xbf16>, vector<32x16xf32> -> vector<32x16xf32>
    %c0_17 = arith.constant 0 : index
    %c0_18 = arith.constant 0 : index
    %25 = vector.load %arg7[%c0_17, %c0_18] : memref<1x16xf32, #tpu.memory_space<vmem>>, vector<1x16xf32>
    %26 = vector.broadcast %25 : vector<1x16xf32> to vector<32x16xf32>
    %27 = arith.addf %24, %26 : vector<32x16xf32>
    %cst_19 = arith.constant 0.000000e+00 : f32
    %28 = vector.broadcast %cst_19 : f32 to vector<32x16xf32>
    %29 = arith.cmpf ogt, %27, %28 : vector<32x16xf32>
    %cst_20 = arith.constant 0.00999999977 : f32
    %30 = vector.broadcast %cst_20 : f32 to vector<32x16xf32>
    %31 = arith.mulf %30, %27 : vector<32x16xf32>
    %32 = arith.select %29, %27, %31 : vector<32x16xi1>, vector<32x16xf32>
    %c0_21 = arith.constant 0 : index
    %c0_22 = arith.constant 0 : index
    %33 = vector.load %arg8[%c0_21, %c0_22] : memref<1x16xf32, #tpu.memory_space<vmem>>, vector<1x16xf32>
    %34 = vector.broadcast %33 : vector<1x16xf32> to vector<32x16xf32>
    %35 = arith.mulf %32, %34 : vector<32x16xf32>
    %cst_23 = arith.constant dense<0.000000e+00> : vector<32xf32>
    %36 = vector.multi_reduction <add>, %35, %cst_23 [1] : vector<32x16xf32> to vector<32xf32>
    %37 = vector.shape_cast %36 : vector<32xf32> to vector<32x1xf32>
    %c0_24 = arith.constant 0 : index
    %c0_25 = arith.constant 0 : index
    %38 = vector.load %arg9[%c0_24, %c0_25] : memref<1x1xf32, #tpu.memory_space<vmem>>, vector<1x1xf32>
    %39 = vector.broadcast %38 : vector<1x1xf32> to vector<32x1xf32>
    %40 = arith.addf %37, %39 : vector<32x1xf32>
    %41 = arith.negf %40 : vector<32x1xf32>
    %42 = math.exp %41 : vector<32x1xf32>
    %cst_26 = arith.constant 1.000000e+00 : f32
    %43 = vector.broadcast %cst_26 : f32 to vector<32x1xf32>
    %44 = arith.addf %43, %42 : vector<32x1xf32>
    %45 = arith.divf %43, %44 : vector<32x1xf32>
    %c0_27 = arith.constant 0 : index
    %c0_28 = arith.constant 0 : index
    %46 = vector.load %arg10[%c0_27, %c0_28] : memref<32x1xf32, #tpu.memory_space<vmem>>, vector<32x1xf32>
    tpu.vector_store %arg10[%c0_27, %c0_28], %45 {strides = array<i32>} : memref<32x1xf32, #tpu.memory_space<vmem>>, vector<32x1xf32>,
    return
  }
  func.func @transform_0(%arg0: i32) -> (i32, i32) {
    %c0_i32 = arith.constant 0 : i32
    %c0_i32_0 = arith.constant 0 : i32
    return %arg0, %c0_i32 : i32, i32
  }
  func.func @transform_1(%arg0: i32) -> (i32, i32) {
    %c0_i32 = arith.constant 0 : i32
    %c0_i32_0 = arith.constant 0 : i32
    %c0_i32_1 = arith.constant 0 : i32
    return %c0_i32, %c0_i32_0 : i32, i32
  }
  func.func @transform_2(%arg0: i32) -> (i32, i32) {
    %c0_i32 = arith.constant 0 : i32
    %c0_i32_0 = arith.constant 0 : i32
    %c0_i32_1 = arith.constant 0 : i32
    return %c0_i32, %c0_i32_0 : i32, i32
  }
  func.func @transform_3(%arg0: i32) -> (i32, i32) {
    %c0_i32 = arith.constant 0 : i32
    %c0_i32_0 = arith.constant 0 : i32
    %c0_i32_1 = arith.constant 0 : i32
    return %c0_i32, %c0_i32_0 : i32, i32
  }
  func.func @transform_4(%arg0: i32) -> (i32, i32) {
    %c0_i32 = arith.constant 0 : i32
    %c0_i32_0 = arith.constant 0 : i32
    %c0_i32_1 = arith.constant 0 : i32
    return %c0_i32, %c0_i32_0 : i32, i32
  }
  func.func @transform_5(%arg0: i32) -> (i32, i32) {
    %c0_i32 = arith.constant 0 : i32
    %c0_i32_0 = arith.constant 0 : i32
    %c0_i32_1 = arith.constant 0 : i32
    return %c0_i32, %c0_i32_0 : i32, i32
  }
  func.func @transform_6(%arg0: i32) -> (i32, i32) {
    %c0_i32 = arith.constant 0 : i32
    %c0_i32_0 = arith.constant 0 : i32
    %c0_i32_1 = arith.constant 0 : i32
    return %c0_i32, %c0_i32_0 : i32, i32
  }
  func.func @transform_7(%arg0: i32) -> (i32, i32) {
    %c0_i32 = arith.constant 0 : i32
    %c0_i32_0 = arith.constant 0 : i32
    %c0_i32_1 = arith.constant 0 : i32
    return %c0_i32, %c0_i32_0 : i32, i32
  }
  func.func @transform_8(%arg0: i32) -> (i32, i32) {
    %c0_i32 = arith.constant 0 : i32
    %c0_i32_0 = arith.constant 0 : i32
    %c0_i32_1 = arith.constant 0 : i32
    return %c0_i32, %c0_i32_0 : i32, i32
  }
  func.func @transform_9(%arg0: i32) -> (i32, i32) {
    %c0_i32 = arith.constant 0 : i32
    %c0_i32_0 = arith.constant 0 : i32
    return %arg0, %c0_i32 : i32, i32
  }
}

</mosaic_0001>

<llo_original>
// kernel: tpu_custom_call.1
$region0: #{tpu_custom_call.1}
  #allocation0 [shape = 'u32[]', space=smem, size = 0x4, offset = 0x4, fixed_abs, tag = 'smem constant byte address 0x4 - core index']
  #allocation1 [shape = 'u32[144,128]{1,0:T(1,128)}', space=vmem, size = 0x12000, scoped, tag = 'internal scratch']
  #allocation2 [shape = 'f32[1,1]{1,0:T(1,128)S(1)}', space=vmem, size = 0x200, scoped, tag = 'scoped memory for tpu_custom_call.1']
  %s0 = inlined_call_operand.vmem [shape: bf16[64,128], index: 0, kind: input, shape index: {}]
  %s1 = inlined_call_operand.hbm [shape: bf16[128,512], index: 1, kind: input, shape index: {}]
  %s2 = inlined_call_operand.vmem [shape: f32[1,512], index: 2, kind: input, shape index: {}]
  %s3 = inlined_call_operand.hbm [shape: bf16[512,128], index: 3, kind: input, shape index: {}]
  %s4 = inlined_call_operand.vmem [shape: f32[1,128], index: 4, kind: input, shape index: {}]
  %s5 = inlined_call_operand.vmem [shape: bf16[128,16], index: 5, kind: input, shape index: {}]
  %s6 = inlined_call_operand.vmem [shape: f32[1,16], index: 6, kind: input, shape index: {}]
  %s7 = inlined_call_operand.vmem [shape: f32[1,16], index: 7, kind: input, shape index: {}]
  %s8 = inlined_call_operand.<no memory space> [shape: f32[1,1], index: 8, kind: input, shape index: {}]
  %s9 = inlined_call_operand.vmem [shape: f32[64,1], index: 9, kind: output, shape index: {}]
  %s10 = sld [smem:[#allocation0]]
  $region77: #{tpu_custom_call.1} parent=0
    _
  %s12 = ssub.s32 1, %s10
  %s13 = scalar_select 0, %s12, %s10
  %v14 = vstv %s8
  %15 = vst [vmem:[#allocation2] sm:$0x1] %v14
  $region1: #{tpu_custom_call.1} parent=0
    #allocation3 [shape = 'u8[131072]{0}', space=vmem, size = 0x20000, scoped, tag = 'input window, operand 1, single buffered']
    #allocation4 [shape = 's32[2]{0}', space=sflag, size = 0x8, scoped, tag = 'scoped memory for tpu_custom_call.1']
    #allocation5 [shape = 'u8[131072]{0}', space=vmem, size = 0x20000, scoped, tag = 'input window, operand 3, single buffered']
    #allocation6 [shape = 's32[1]{0}', space=sflag, size = 0x4, scoped, tag = 'scoped memory for tpu_custom_call.1']
    %16 = vsyncpa [#allocation4], 0
    %17 = vsyncpa [#allocation6], 0
    loop: start=0, step=1, limit=4
    $region2: #{tpu_custom_call.1} parent=1 // loop_pre_header
      _
    $region3: #{tpu_custom_call.1} parent=1 // loop_header
      %s19 = sphi 0, %s23
      %p20 = scmp.ge.s32.totalorder %s19, 4
      %s29 = sphi 0, %s31
      %s32 = sphi 0, %s29
      %s33 = sphi 0, %s32
      %s49 = sphi 0, %s33
      %s53 = sphi 0, %s53
      %s55 = sphi 0, %s53
      %s56 = sphi 0, %s55
      %s70 = sphi 0, %s56
      %s74 = sphi 0, %s74
      %s76 = sphi 0, %s74
      %s77 = sphi 0, %s76
      %s91 = sphi 0, %s77
      %s95 = sphi 0, %s95
      %s97 = sphi 0, %s95
      %s98 = sphi 0, %s97
      %s112 = sphi 0, %s98
      %s116 = sphi 0, %s116
      %s118 = sphi 0, %s116
      %s119 = sphi 0, %s118
      %s133 = sphi 0, %s119
      %s137 = sphi 0, %s137
      %s139 = sphi 0, %s137
      %s140 = sphi 0, %s139
      %s154 = sphi 0, %s140
      %s158 = sphi 0, %s158
      %s160 = sphi 0, %s158
      %s161 = sphi 0, %s160
      %s175 = sphi 0, %s161
      %s179 = sphi 0, %s179
      %s181 = sphi 0, %s179
      %s182 = sphi 0, %s181
      %s196 = sphi 0, %s182
      %s200 = sphi 0, %s200
      %s202 = sphi 0, %s200
      %s203 = sphi 0, %s202
      %s217 = sphi 0, %s203
      %s223 = sphi 0, %s225
      %s226 = sphi 0, %s223
      %s227 = sphi 0, %s226
      %s243 = sphi 0, %s227
    $region4: #{tpu_custom_call.1} parent=1 // loop_header_branch
      %22 = sbr.rel (%p20) target = $region8
    $region5: #{tpu_custom_call.1} parent=1 // loop_body
      %s24 = ssub.s32 %s19, 1
      %s25 = ssub.s32 %s19, 2
      %s26 = sadd.s32 %s19, 1
      %s27 = ssub.s32 %s19, %s26
      %p28 = scmp.eq.s32.totalorder %s27, 0
      %s30 = sadd.s32 %s29, 1
      %s31 = scalar_select %p28, %s29, %s30
      %p34 = pneg %p28
      %p35 = scmp.eq.s32.totalorder %s19, 1
      %p36 = por %p34, %p35
      %p37 = scmp.ne.s32.totalorder %s29, %s32
      %p38 = scmp.eq.s32.totalorder %s19, 0
      %p39 = por %p37, %p38
      %p40 = scmp.ne.s32.totalorder %s29, %s32
      %p41 = scmp.eq.s32.totalorder %s24, 1
      %p42 = por %p40, %p41
      %p43 = scmp.ne.s32.totalorder %s32, %s33
      %p44 = scmp.eq.s32.totalorder %s24, 0
      %p45 = por %p43, %p44
      %p46 = scmp.ne.s32.totalorder %s32, %s33
      %p47 = scmp.eq.s32.totalorder %s25, 1
      %p48 = por %p46, %p47
      %p50 = scmp.ne.s32.totalorder %s33, %s49
      %p51 = scmp.eq.s32.totalorder %s25, 0
      %p52 = por %p50, %p51
      %s54 = sadd.s32 %s53, 1
      %p57 = scmp.eq.s32.totalorder %s19, 1
      %p58 = scmp.ne.s32.totalorder %s53, %s55
      %p59 = scmp.eq.s32.totalorder %s19, 0
      %p60 = por %p58, %p59
      %p61 = scmp.ne.s32.totalorder %s53, %s55
      %p62 = scmp.eq.s32.totalorder %s24, 1
      %p63 = por %p61, %p62
      %p64 = scmp.ne.s32.totalorder %s55, %s56
      %p65 = scmp.eq.s32.totalorder %s24, 0
      %p66 = por %p64, %p65
      %p67 = scmp.ne.s32.totalorder %s55, %s56
      %p68 = scmp.eq.s32.totalorder %s25, 1
      %p69 = por %p67, %p68
      %p71 = scmp.ne.s32.totalorder %s56, %s70
      %p72 = scmp.eq.s32.totalorder %s25, 0
      %p73 = por %p71, %p72
      %s75 = sadd.s32 %s74, 1
      %p78 = scmp.eq.s32.totalorder %s19, 1
      %p79 = scmp.ne.s32.totalorder %s74, %s76
      %p80 = scmp.eq.s32.totalorder %s19, 0
      %p81 = por %p79, %p80
      %p82 = scmp.ne.s32.totalorder %s74, %s76
      %p83 = scmp.eq.s32.totalorder %s24, 1
      %p84 = por %p82, %p83
      %p85 = scmp.ne.s32.totalorder %s76, %s77
      %p86 = scmp.eq.s32.totalorder %s24, 0
      %p87 = por %p85, %p86
      %p88 = scmp.ne.s32.totalorder %s76, %s77
      %p89 = scmp.eq.s32.totalorder %s25, 1
      %p90 = por %p88, %p89
      %p92 = scmp.ne.s32.totalorder %s77, %s91
      %p93 = scmp.eq.s32.totalorder %s25, 0
      %p94 = por %p92, %p93
      %s96 = sadd.s32 %s95, 1
      %p99 = scmp.eq.s32.totalorder %s19, 1
      %p100 = scmp.ne.s32.totalorder %s95, %s97
      %p101 = scmp.eq.s32.totalorder %s19, 0
      %p102 = por %p100, %p101
      %p103 = scmp.ne.s32.totalorder %s95, %s97
      %p104 = scmp.eq.s32.totalorder %s24, 1
      %p105 = por %p103, %p104
      %p106 = scmp.ne.s32.totalorder %s97, %s98
      %p107 = scmp.eq.s32.totalorder %s24, 0
      %p108 = por %p106, %p107
      %p109 = scmp.ne.s32.totalorder %s97, %s98
      %p110 = scmp.eq.s32.totalorder %s25, 1
      %p111 = por %p109, %p110
      %p113 = scmp.ne.s32.totalorder %s98, %s112
      %p114 = scmp.eq.s32.totalorder %s25, 0
      %p115 = por %p113, %p114
      %s117 = sadd.s32 %s116, 1
      %p120 = scmp.eq.s32.totalorder %s19, 1
      %p121 = scmp.ne.s32.totalorder %s116, %s118
      %p122 = scmp.eq.s32.totalorder %s19, 0
      %p123 = por %p121, %p122
      %p124 = scmp.ne.s32.totalorder %s116, %s118
      %p125 = scmp.eq.s32.totalorder %s24, 1
      %p126 = por %p124, %p125
      %p127 = scmp.ne.s32.totalorder %s118, %s119
      %p128 = scmp.eq.s32.totalorder %s24, 0
      %p129 = por %p127, %p128
      %p130 = scmp.ne.s32.totalorder %s118, %s119
      %p131 = scmp.eq.s32.totalorder %s25, 1
      %p132 = por %p130, %p131
      %p134 = scmp.ne.s32.totalorder %s119, %s133
      %p135 = scmp.eq.s32.totalorder %s25, 0
      %p136 = por %p134, %p135
      %s138 = sadd.s32 %s137, 1
      %p141 = scmp.eq.s32.totalorder %s19, 1
      %p142 = scmp.ne.s32.totalorder %s137, %s139
      %p143 = scmp.eq.s32.totalorder %s19, 0
      %p144 = por %p142, %p143
      %p145 = scmp.ne.s32.totalorder %s137, %s139
      %p146 = scmp.eq.s32.totalorder %s24, 1
      %p147 = por %p145, %p146
      %p148 = scmp.ne.s32.totalorder %s139, %s140
      %p149 = scmp.eq.s32.totalorder %s24, 0
      %p150 = por %p148, %p149
      %p151 = scmp.ne.s32.totalorder %s139, %s140
      %p152 = scmp.eq.s32.totalorder %s25, 1
      %p153 = por %p151, %p152
      %p155 = scmp.ne.s32.totalorder %s140, %s154
      %p156 = scmp.eq.s32.totalorder %s25, 0
      %p157 = por %p155, %p156
      %s159 = sadd.s32 %s158, 1
      %p162 = scmp.eq.s32.totalorder %s19, 1
      %p163 = scmp.ne.s32.totalorder %s158, %s160
      %p164 = scmp.eq.s32.totalorder %s19, 0
      %p165 = por %p163, %p164
      %p166 = scmp.ne.s32.totalorder %s158, %s160
      %p167 = scmp.eq.s32.totalorder %s24, 1
      %p168 = por %p166, %p167
      %p169 = scmp.ne.s32.totalorder %s160, %s161
      %p170 = scmp.eq.s32.totalorder %s24, 0
      %p171 = por %p169, %p170
      %p172 = scmp.ne.s32.totalorder %s160, %s161
      %p173 = scmp.eq.s32.totalorder %s25, 1
      %p174 = por %p172, %p173
      %p176 = scmp.ne.s32.totalorder %s161, %s175
      %p177 = scmp.eq.s32.totalorder %s25, 0
      %p178 = por %p176, %p177
      %s180 = sadd.s32 %s179, 1
      %p183 = scmp.eq.s32.totalorder %s19, 1
      %p184 = scmp.ne.s32.totalorder %s179, %s181
      %p185 = scmp.eq.s32.totalorder %s19, 0
      %p186 = por %p184, %p185
      %p187 = scmp.ne.s32.totalorder %s179, %s181
      %p188 = scmp.eq.s32.totalorder %s24, 1
      %p189 = por %p187, %p188
      %p190 = scmp.ne.s32.totalorder %s181, %s182
      %p191 = scmp.eq.s32.totalorder %s24, 0
      %p192 = por %p190, %p191
      %p193 = scmp.ne.s32.totalorder %s181, %s182
      %p194 = scmp.eq.s32.totalorder %s25, 1
      %p195 = por %p193, %p194
      %p197 = scmp.ne.s32.totalorder %s182, %s196
      %p198 = scmp.eq.s32.totalorder %s25, 0
      %p199 = por %p197, %p198
      %s201 = sadd.s32 %s200, 1
      %p204 = scmp.eq.s32.totalorder %s19, 1
      %p205 = scmp.ne.s32.totalorder %s200, %s202
      %p206 = scmp.eq.s32.totalorder %s19, 0
      %p207 = por %p205, %p206
      %p208 = scmp.ne.s32.totalorder %s200, %s202
      %p209 = scmp.eq.s32.totalorder %s24, 1
      %p210 = por %p208, %p209
      %p211 = scmp.ne.s32.totalorder %s202, %s203
      %p212 = scmp.eq.s32.totalorder %s24, 0
      %p213 = por %p211, %p212
      %p214 = scmp.ne.s32.totalorder %s202, %s203
      %p215 = scmp.eq.s32.totalorder %s25, 1
      %p216 = por %p214, %p215
      %p218 = scmp.ne.s32.totalorder %s203, %s217
      %p219 = scmp.eq.s32.totalorder %s25, 0
      %p220 = por %p218, %p219
      %s221 = ssub.s32 %s19, %s26
      %p222 = scmp.eq.s32.totalorder %s221, 0
      %s224 = sadd.s32 %s223, 1
      %s225 = scalar_select %p222, %s223, %s224
      %p228 = pneg %p222
      %p229 = scmp.eq.s32.totalorder %s19, 1
      %p230 = por %p228, %p229
      %p231 = scmp.ne.s32.totalorder %s223, %s226
      %p232 = scmp.eq.s32.totalorder %s19, 0
      %p233 = por %p231, %p232
      %p234 = scmp.ne.s32.totalorder %s223, %s226
      %p235 = scmp.eq.s32.totalorder %s24, 1
      %p236 = por %p234, %p235
      %p237 = scmp.ne.s32.totalorder %s226, %s227
      %p238 = scmp.eq.s32.totalorder %s24, 0
      %p239 = por %p237, %p238
      %p240 = scmp.ne.s32.totalorder %s226, %s227
      %p241 = scmp.eq.s32.totalorder %s25, 1
      %p242 = por %p240, %p241
      %p244 = scmp.ne.s32.totalorder %s227, %s243
      %p245 = scmp.eq.s32.totalorder %s25, 0
      %p246 = por %p244, %p245
      %p247 = scmp.le.s32.totalorder 1, %s19
      %p248 = scmp.lt.s32.totalorder %s19, 3
      %p249 = pnand %p247, %p248
      %p250 = pneg %p249
      // Predicated region
      $region9: #{tpu_custom_call.1} parent=5 // pred_check
        _
      $region10: #{tpu_custom_call.1} parent=5 // pred_check_branch
        %252 = sbr.rel (%p249) target = $region12
      $region11: #{tpu_custom_call.1} parent=5 // pred_region
        %s253 = ssub.s32 %s19, 1
        // Predicated region
        $region13: #{tpu_custom_call.1} parent=11 // pred_check
          %p254 = pneg %p66
        $region14: #{tpu_custom_call.1} parent=11 // pred_check_branch
          %256 = sbr.rel (%p254) target = $region16
        $region15: #{tpu_custom_call.1} parent=11 // pred_region
          %s258 = ssub.s32 4096, 4096
          %259 = vsyncadd [#allocation4], %s258
          %s260 = sshll.u32 [#allocation3], 4
          %s261 = int_to_ptr.vmem [resolvable:$true] %s260
          %266 = dma.hbm_to_vmem [thread:$0]  %s1, 4096, %s261, [#allocation4], 256, 256, 16
        $region16: #{tpu_custom_call.1} parent=11 // pred_fallthru
          _
        // Predicated region
        $region17: #{tpu_custom_call.1} parent=11 // pred_check
          %p267 = pneg %p87
        $region18: #{tpu_custom_call.1} parent=11 // pred_check_branch
          %269 = sbr.rel (%p267) target = $region20
        $region19: #{tpu_custom_call.1} parent=11 // pred_region
          _
        $region20: #{tpu_custom_call.1} parent=11 // pred_fallthru
          _
        // Predicated region
        $region21: #{tpu_custom_call.1} parent=11 // pred_check
          %p270 = pneg %p108
        $region22: #{tpu_custom_call.1} parent=11 // pred_check_branch
          %272 = sbr.rel (%p270) target = $region24
        $region23: #{tpu_custom_call.1} parent=11 // pred_region
          %s274 = ssub.s32 4096, 4096
          %275 = vsyncadd [#allocation6], %s274
          %s276 = sshll.u32 [#allocation5], 4
          %s277 = int_to_ptr.vmem [resolvable:$true] %s276
          %282 = dma.hbm_to_vmem [thread:$0]  %s3, 4096, %s277, [#allocation6], 64, 64, 4
        $region24: #{tpu_custom_call.1} parent=11 // pred_fallthru
          _
        // Predicated region
        $region25: #{tpu_custom_call.1} parent=11 // pred_check
          %p283 = pneg %p129
        $region26: #{tpu_custom_call.1} parent=11 // pred_check_branch
          %285 = sbr.rel (%p283) target = $region28
        $region27: #{tpu_custom_call.1} parent=11 // pred_region
          _
        $region28: #{tpu_custom_call.1} parent=11 // pred_fallthru
          _
        // Predicated region
        $region29: #{tpu_custom_call.1} parent=11 // pred_check
          %p286 = pneg %p150
        $region30: #{tpu_custom_call.1} parent=11 // pred_check_branch
          %288 = sbr.rel (%p286) target = $region32
        $region31: #{tpu_custom_call.1} parent=11 // pred_region
          _
        $region32: #{tpu_custom_call.1} parent=11 // pred_fallthru
          _
        // Predicated region
        $region33: #{tpu_custom_call.1} parent=11 // pred_check
          %p289 = pneg %p171
        $region34: #{tpu_custom_call.1} parent=11 // pred_check_branch
          %291 = sbr.rel (%p289) target = $region36
        $region35: #{tpu_custom_call.1} parent=11 // pred_region
          _
        $region36: #{tpu_custom_call.1} parent=11 // pred_fallthru
          _
        // Predicated region
        $region37: #{tpu_custom_call.1} parent=11 // pred_check
          %p292 = pneg %p192
        $region38: #{tpu_custom_call.1} parent=11 // pred_check_branch
          %294 = sbr.rel (%p292) target = $region40
        $region39: #{tpu_custom_call.1} parent=11 // pred_region
          _
        $region40: #{tpu_custom_call.1} parent=11 // pred_fallthru
          _
        // Predicated region
        $region41: #{tpu_custom_call.1} parent=11 // pred_check
          %p295 = pneg %p213
        $region42: #{tpu_custom_call.1} parent=11 // pred_check_branch
          %297 = sbr.rel (%p295) target = $region44
        $region43: #{tpu_custom_call.1} parent=11 // pred_region
          _
        $region44: #{tpu_custom_call.1} parent=11 // pred_fallthru
          _
      $region12: #{tpu_custom_call.1} parent=5 // pred_fallthru
        _
      %p298 = scmp.lt.s32.totalorder %s19, 2
      // Predicated region
      $region45: #{tpu_custom_call.1} parent=5 // pred_check
        %p299 = pneg %p298
      $region46: #{tpu_custom_call.1} parent=5 // pred_check_branch
        %301 = sbr.rel (%p299) target = $region48
      $region47: #{tpu_custom_call.1} parent=5 // pred_region
        // Predicated region
        $region49: #{tpu_custom_call.1} parent=47 // pred_check
          %p302 = pneg %p39
        $region50: #{tpu_custom_call.1} parent=47 // pred_check_branch
          %304 = sbr.rel (%p302) target = $region52
        $region51: #{tpu_custom_call.1} parent=47 // pred_region
          %s305 = smul.u32 4, %s19
          %p306 = scmp.lt.s32.totalorder %s305, 7
          %s307 = scalar_select %p306, %s305, 7
          %s308 = smul.addr %s307, 4
          %s309 = scalar_lea.vmem %s0, %s308
          %s310 = smul.u32 4, %s19
        $region52: #{tpu_custom_call.1} parent=47 // pred_fallthru
          _
      $region48: #{tpu_custom_call.1} parent=5 // pred_fallthru
        _
      %p311 = scmp.le.s32.totalorder 1, %s19
      %p312 = scmp.lt.s32.totalorder %s19, 3
      %p313 = pnand %p311, %p312
      %p314 = pneg %p313
      // Predicated region
      $region53: #{tpu_custom_call.1} parent=5 // pred_check
        _
      $region54: #{tpu_custom_call.1} parent=5 // pred_check_branch
        %316 = sbr.rel (%p313) target = $region56
      $region55: #{tpu_custom_call.1} parent=5 // pred_region
        %s317 = ssub.s32 %s19, 1
        // Predicated region
        $region57: #{tpu_custom_call.1} parent=55 // pred_check
          %p318 = pneg %p66
        $region58: #{tpu_custom_call.1} parent=55 // pred_check_branch
          %320 = sbr.rel (%p318) target = $region60
        $region59: #{tpu_custom_call.1} parent=55 // pred_region
          %321 = dma.done [#allocation4], 4096
        $region60: #{tpu_custom_call.1} parent=55 // pred_fallthru
          _
        // Predicated region
        $region61: #{tpu_custom_call.1} parent=55 // pred_check
          %p322 = pneg %p108
        $region62: #{tpu_custom_call.1} parent=55 // pred_check_branch
          %324 = sbr.rel (%p322) target = $region64
        $region63: #{tpu_custom_call.1} parent=55 // pred_region
          %325 = dma.done [#allocation6], 4096
        $region64: #{tpu_custom_call.1} parent=55 // pred_fallthru
          _
        %s326 = smul.u32 4, %s24
        %p327 = scmp.lt.s32.totalorder %s326, 7
        %s328 = scalar_select %p327, %s326, 7
        %s329 = smul.addr %s328, 4
        %s330 = scalar_lea.vmem %s0, %s329
        %p331 = pneg %p45
        %p332 = pneg %p42
        %p333 = pneg %p66
        %p334 = pneg %p63
        %p335 = pneg %p87
        %p336 = pneg %p84
        %p337 = pneg %p108
        %p338 = pneg %p105
        %p339 = pneg %p129
        %p340 = pneg %p126
        %p341 = pneg %p150
        %p342 = pneg %p147
        %p343 = pneg %p171
        %p344 = pneg %p168
        %p345 = pneg %p192
        %p346 = pneg %p189
        %p347 = pneg %p213
        %p348 = pneg %p210
        %p349 = pneg %p239
        %p350 = pneg %p236
        %s351 = smul.u32 4, %s24
        %p352 = scmp.lt.s32.totalorder %s351, 7
        %s353 = scalar_select %p352, %s351, 7
        %s354 = smul.addr %s353, 8
        %s355 = scalar_lea.vmem %s9, %s354
        %s356 = smul.u32 4, %s24
        %p357 = scmp.lt.s32.totalorder %s356, 7
        %s358 = scalar_select %p357, %s356, 7
        %s359 = smul.addr %s358, 4
        %s360 = scalar_lea.vmem %s0, %s359
        %s361 = smul.u32 4, %s24
        %s362 = smul.u32 4, %s24
        %p363 = scmp.lt.s32.totalorder %s362, 7
        %s364 = scalar_select %p363, %s362, 7
        %s365 = smul.addr %s364, 8
        %s366 = scalar_lea.vmem %s9, %s365
        %s367 = smul.u32 4, %s24
        %v369 = vld [vmem:[%s360] sm:$0xf]
        %v370 = vld [vmem:[%s360 + $0x4] sm:$0xf]
        %v371 = vld [vmem:[%s360 + $0x8] sm:$0xf]
        %v372 = vld [vmem:[%s360 + $0xc] sm:$0xf]
        %v373 = vld [vmem:[#allocation3] sm:$0xff]
        %v374 = vld [vmem:[#allocation3 + $0x8] sm:$0xff]
        %v375 = vld [vmem:[#allocation3 + $0x10] sm:$0xff]
        %v376 = vld [vmem:[#allocation3 + $0x18] sm:$0xff]
        %v377 = vld [vmem:[#allocation3 + $0x20] sm:$0xff]
        %v378 = vld [vmem:[#allocation3 + $0x28] sm:$0xff]
        %v379 = vld [vmem:[#allocation3 + $0x30] sm:$0xff]
        %v380 = vld [vmem:[#allocation3 + $0x38] sm:$0xff]
        %v381 = vld [vmem:[#allocation3 + $0x40] sm:$0xff]
        %v382 = vld [vmem:[#allocation3 + $0x48] sm:$0xff]
        %v383 = vld [vmem:[#allocation3 + $0x50] sm:$0xff]
        %v384 = vld [vmem:[#allocation3 + $0x58] sm:$0xff]
        %v385 = vld [vmem:[#allocation3 + $0x60] sm:$0xff]
        %v386 = vld [vmem:[#allocation3 + $0x68] sm:$0xff]
        %v387 = vld [vmem:[#allocation3 + $0x70] sm:$0xff]
        %v388 = vld [vmem:[#allocation3 + $0x78] sm:$0xff]
        %v389 = vld [vmem:[#allocation3 + $0x80] sm:$0xff]
        %v390 = vld [vmem:[#allocation3 + $0x88] sm:$0xff]
        %v391 = vld [vmem:[#allocation3 + $0x90] sm:$0xff]
        %v392 = vld [vmem:[#allocation3 + $0x98] sm:$0xff]
        %v393 = vld [vmem:[#allocation3 + $0xa0] sm:$0xff]
        %v394 = vld [vmem:[#allocation3 + $0xa8] sm:$0xff]
        %v395 = vld [vmem:[#allocation3 + $0xb0] sm:$0xff]
        %v396 = vld [vmem:[#allocation3 + $0xb8] sm:$0xff]
        %v397 = vld [vmem:[#allocation3 + $0xc0] sm:$0xff]
        %v398 = vld [vmem:[#allocation3 + $0xc8] sm:$0xff]
        %v399 = vld [vmem:[#allocation3 + $0xd0] sm:$0xff]
        %v400 = vld [vmem:[#allocation3 + $0xd8] sm:$0xff]
        %v401 = vld [vmem:[#allocation3 + $0xe0] sm:$0xff]
        %v402 = vld [vmem:[#allocation3 + $0xe8] sm:$0xff]
        %v403 = vld [vmem:[#allocation3 + $0xf0] sm:$0xff]
        %v404 = vld [vmem:[#allocation3 + $0xf8] sm:$0xff]
        %v405 = vld [vmem:[%s2] sm:$0xf]
        %v407 = vlaneseq
        %v408 = vshrl.u32 %v407, 7
        %v409 = vsub.s32 0, %v408
        %v410 = vrot.slane %v405, %v409
        %v411 = vlaneseq
        %v412 = vshrl.u32 %v411, 7
        %v413 = vsub.s32 1, %v412
        %v414 = vrot.slane %v405, %v413
        %v415 = vlaneseq
        %v416 = vshrl.u32 %v415, 7
        %v417 = vsub.s32 2, %v416
        %v418 = vrot.slane %v405, %v417
        %v419 = vlaneseq
        %v420 = vshrl.u32 %v419, 7
        %v421 = vsub.s32 3, %v420
        %v422 = vrot.slane %v405, %v421
        %v431 = vunpack.c.l.b16 %v369
        %v432 = vunpack.c.l.b16 %v370
        %v433 = vunpack.c.l.b16 %v371
        %v434 = vunpack.c.l.b16 %v372
        %v435 = vpack.c.b16 %v432, %v431
        %v436 = vpack.c.b16 %v434, %v433
        %v471 = vunpack.c.l.b16 %v373
        %v472 = vunpack.c.h.b16 %v373
        %v473 = vunpack.c.l.b16 %v374
        %v474 = vunpack.c.h.b16 %v374
        %v475 = vunpack.c.l.b16 %v375
        %v476 = vunpack.c.h.b16 %v375
        %v477 = vunpack.c.l.b16 %v376
        %v478 = vunpack.c.h.b16 %v376
        %v479 = vunpack.c.l.b16 %v377
        %v480 = vunpack.c.h.b16 %v377
        %v481 = vunpack.c.l.b16 %v378
        %v482 = vunpack.c.h.b16 %v378
        %v483 = vunpack.c.l.b16 %v379
        %v484 = vunpack.c.h.b16 %v379
        %v485 = vunpack.c.l.b16 %v380
        %v486 = vunpack.c.h.b16 %v380
        %v487 = vunpack.c.l.b16 %v381
        %v488 = vunpack.c.h.b16 %v381
        %v489 = vunpack.c.l.b16 %v382
        %v490 = vunpack.c.h.b16 %v382
        %v491 = vunpack.c.l.b16 %v383
        %v492 = vunpack.c.h.b16 %v383
        %v493 = vunpack.c.l.b16 %v384
        %v494 = vunpack.c.h.b16 %v384
        %v495 = vunpack.c.l.b16 %v385
        %v496 = vunpack.c.h.b16 %v385
        %v497 = vunpack.c.l.b16 %v386
        %v498 = vunpack.c.h.b16 %v386
        %v499 = vunpack.c.l.b16 %v387
        %v500 = vunpack.c.h.b16 %v387
        %v501 = vunpack.c.l.b16 %v388
        %v502 = vunpack.c.h.b16 %v388
        %v503 = vunpack.c.l.b16 %v389
        %v504 = vunpack.c.h.b16 %v389
        %v505 = vunpack.c.l.b16 %v390
        %v506 = vunpack.c.h.b16 %v390
        %v507 = vunpack.c.l.b16 %v391
        %v508 = vunpack.c.h.b16 %v391
        %v509 = vunpack.c.l.b16 %v392
        %v510 = vunpack.c.h.b16 %v392
        %v511 = vunpack.c.l.b16 %v393
        %v512 = vunpack.c.h.b16 %v393
        %v513 = vunpack.c.l.b16 %v394
        %v514 = vunpack.c.h.b16 %v394
        %v515 = vunpack.c.l.b16 %v395
        %v516 = vunpack.c.h.b16 %v395
        %v517 = vunpack.c.l.b16 %v396
        %v518 = vunpack.c.h.b16 %v396
        %v519 = vunpack.c.l.b16 %v397
        %v520 = vunpack.c.h.b16 %v397
        %v521 = vunpack.c.l.b16 %v398
        %v522 = vunpack.c.h.b16 %v398
        %v523 = vunpack.c.l.b16 %v399
        %v524 = vunpack.c.h.b16 %v399
        %v525 = vunpack.c.l.b16 %v400
        %v526 = vunpack.c.h.b16 %v400
        %v527 = vunpack.c.l.b16 %v401
        %v528 = vunpack.c.h.b16 %v401
        %v529 = vunpack.c.l.b16 %v402
        %v530 = vunpack.c.h.b16 %v402
        %v531 = vunpack.c.l.b16 %v403
        %v532 = vunpack.c.h.b16 %v403
        %v533 = vunpack.c.l.b16 %v404
        %v534 = vunpack.c.h.b16 %v404
        %v535 = vpack.c.b16 %v475, %v471
        %v536 = vpack.c.b16 %v476, %v472
        %v537 = vpack.c.b16 %v477, %v473
        %v538 = vpack.c.b16 %v478, %v474
        %v539 = vpack.c.b16 %v483, %v479
        %v540 = vpack.c.b16 %v484, %v480
        %v541 = vpack.c.b16 %v485, %v481
        %v542 = vpack.c.b16 %v486, %v482
        %v543 = vpack.c.b16 %v491, %v487
        %v544 = vpack.c.b16 %v492, %v488
        %v545 = vpack.c.b16 %v493, %v489
        %v546 = vpack.c.b16 %v494, %v490
        %v547 = vpack.c.b16 %v499, %v495
        %v548 = vpack.c.b16 %v500, %v496
        %v549 = vpack.c.b16 %v501, %v497
        %v550 = vpack.c.b16 %v502, %v498
        %v551 = vpack.c.b16 %v507, %v503
        %v552 = vpack.c.b16 %v508, %v504
        %v553 = vpack.c.b16 %v509, %v505
        %v554 = vpack.c.b16 %v510, %v506
        %v555 = vpack.c.b16 %v515, %v511
        %v556 = vpack.c.b16 %v516, %v512
        %v557 = vpack.c.b16 %v517, %v513
        %v558 = vpack.c.b16 %v518, %v514
        %v559 = vpack.c.b16 %v523, %v519
        %v560 = vpack.c.b16 %v524, %v520
        %v561 = vpack.c.b16 %v525, %v521
        %v562 = vpack.c.b16 %v526, %v522
        %v563 = vpack.c.b16 %v531, %v527
        %v564 = vpack.c.b16 %v532, %v528
        %v565 = vpack.c.b16 %v533, %v529
        %v566 = vpack.c.b16 %v534, %v530
        %599 = vmatprep.subr.bf16.mxu0 %v536
        %600 = vmatpush1.bf16.msra.mxu0 %v535
        %601 = vmatprep.subr.bf16.mxu0 %v540
        %602 = vmatpush1.bf16.msra.mxu0 %v539
        %603 = vmatprep.subr.bf16.mxu0 %v544
        %604 = vmatpush1.bf16.msra.mxu0 %v543
        %605 = vmatprep.subr.bf16.mxu0 %v548
        %606 = vmatpush1.bf16.msra.mxu0 %v547
        %607 = vmatprep.subr.bf16.mxu0 %v552
        %608 = vmatpush1.bf16.msra.mxu0 %v551
        %609 = vmatprep.subr.bf16.mxu0 %v556
        %610 = vmatpush1.bf16.msra.mxu0 %v555
        %611 = vmatprep.subr.bf16.mxu0 %v560
        %612 = vmatpush1.bf16.msra.mxu0 %v559
        %613 = vmatprep.subr.bf16.mxu0 %v564
        %614 = vmatpush1.bf16.msra.mxu0 %v563
        %615 = vmatprep.subr.bf16.mxu0 0
        %616 = vmatpush1.bf16.msra.mxu0 0
        %617 = vmatprep.subr.bf16.mxu0 0
        %618 = vmatpush1.bf16.msra.mxu0 0
        %619 = vmatprep.subr.bf16.mxu0 0
        %620 = vmatpush1.bf16.msra.mxu0 0
        %621 = vmatprep.subr.bf16.mxu0 0
        %622 = vmatpush1.bf16.msra.mxu0 0
        %623 = vmatprep.subr.bf16.mxu0 0
        %624 = vmatpush1.bf16.msra.mxu0 0
        %625 = vmatprep.subr.bf16.mxu0 0
        %626 = vmatpush1.bf16.msra.mxu0 0
        %627 = vmatprep.subr.bf16.mxu0 0
        %628 = vmatpush1.bf16.msra.mxu0 0
        %629 = vmatprep.subr.bf16.mxu0 0
        %630 = vmatpush1.bf16.msra.mxu0 0
        %631 = vmatprep.mubr.bf16.mxu0 0
        %632 = vmatmul.mubr.bf16.gmra.mrb[0].mxu0 %v435
        %v633 = vpop.f32.mrb[0].mxu0
        %v634 = vadd.f32 %v410, %v633
        %v635 = vpop.f32.mrb[0].mxu0
        %v636 = vadd.f32 %v414, %v635
        %v637 = vpop.f32.mrb[0].mxu0
        %v638 = vadd.f32 %v410, %v637
        %v639 = vpop.f32.mrb[0].mxu0
        %v640 = vadd.f32 %v414, %v639
        %641 = vmatprep.mubr.bf16.mxu0 0
        %642 = vmatmul.mubr.bf16.gmra.mrb[0].mxu0 %v436
        %v643 = vpop.f32.mrb[0].mxu0
        %v644 = vadd.f32 %v410, %v643
        %v645 = vpop.f32.mrb[0].mxu0
        %v646 = vadd.f32 %v414, %v645
        %v647 = vpop.f32.mrb[0].mxu0
        %v648 = vadd.f32 %v410, %v647
        %v649 = vpop.f32.mrb[0].mxu0
        %v650 = vadd.f32 %v414, %v649
        %651 = vdwg.mxu0
        %652 = vmatprep.subr.bf16.mxu0 %v538
        %653 = vmatpush1.bf16.msra.mxu0 %v537
        %654 = vmatprep.subr.bf16.mxu0 %v542
        %655 = vmatpush1.bf16.msra.mxu0 %v541
        %656 = vmatprep.subr.bf16.mxu0 %v546
        %657 = vmatpush1.bf16.msra.mxu0 %v545
        %658 = vmatprep.subr.bf16.mxu0 %v550
        %659 = vmatpush1.bf16.msra.mxu0 %v549
        %660 = vmatprep.subr.bf16.mxu0 %v554
        %661 = vmatpush1.bf16.msra.mxu0 %v553
        %662 = vmatprep.subr.bf16.mxu0 %v558
        %663 = vmatpush1.bf16.msra.mxu0 %v557
        %664 = vmatprep.subr.bf16.mxu0 %v562
        %665 = vmatpush1.bf16.msra.mxu0 %v561
        %666 = vmatprep.subr.bf16.mxu0 %v566
        %667 = vmatpush1.bf16.msra.mxu0 %v565
        %668 = vmatprep.subr.bf16.mxu0 0
        %669 = vmatpush1.bf16.msra.mxu0 0
        %670 = vmatprep.subr.bf16.mxu0 0
        %671 = vmatpush1.bf16.msra.mxu0 0
        %672 = vmatprep.subr.bf16.mxu0 0
        %673 = vmatpush1.bf16.msra.mxu0 0
        %674 = vmatprep.subr.bf16.mxu0 0
        %675 = vmatpush1.bf16.msra.mxu0 0
        %676 = vmatprep.subr.bf16.mxu0 0
        %677 = vmatpush1.bf16.msra.mxu0 0
        %678 = vmatprep.subr.bf16.mxu0 0
        %679 = vmatpush1.bf16.msra.mxu0 0
        %680 = vmatprep.subr.bf16.mxu0 0
        %681 = vmatpush1.bf16.msra.mxu0 0
        %682 = vmatprep.subr.bf16.mxu0 0
        %683 = vmatpush1.bf16.msra.mxu0 0
        %684 = vmatprep.mubr.bf16.mxu0 0
        %685 = vmatmul.mubr.bf16.gmra.mrb[0].mxu0 %v435
        %v686 = vpop.f32.mrb[0].mxu0
        %v687 = vadd.f32 %v418, %v686
        %v688 = vpop.f32.mrb[0].mxu0
        %v689 = vadd.f32 %v422, %v688
        %v690 = vpop.f32.mrb[0].mxu0
        %v691 = vadd.f32 %v418, %v690
        %v692 = vpop.f32.mrb[0].mxu0
        %v693 = vadd.f32 %v422, %v692
        %694 = vmatprep.mubr.bf16.mxu0 0
        %695 = vmatmul.mubr.bf16.gmra.mrb[0].mxu0 %v436
        %v696 = vpop.f32.mrb[0].mxu0
        %v697 = vadd.f32 %v418, %v696
        %v698 = vpop.f32.mrb[0].mxu0
        %v699 = vadd.f32 %v422, %v698
        %v700 = vpop.f32.mrb[0].mxu0
        %v701 = vadd.f32 %v418, %v700
        %v702 = vpop.f32.mrb[0].mxu0
        %v703 = vadd.f32 %v422, %v702
        %704 = vdwg.mxu0
        %vm705 = vcmp.gt.f32.partialorder %v634, 0.0
        %vm706 = vcmp.gt.f32.partialorder %v636, 0.0
        %vm707 = vcmp.gt.f32.partialorder %v687, 0.0
        %vm708 = vcmp.gt.f32.partialorder %v689, 0.0
        %vm709 = vcmp.gt.f32.partialorder %v638, 0.0
        %vm710 = vcmp.gt.f32.partialorder %v640, 0.0
        %vm711 = vcmp.gt.f32.partialorder %v691, 0.0
        %vm712 = vcmp.gt.f32.partialorder %v693, 0.0
        %vm713 = vcmp.gt.f32.partialorder %v644, 0.0
        %vm714 = vcmp.gt.f32.partialorder %v646, 0.0
        %vm715 = vcmp.gt.f32.partialorder %v697, 0.0
        %vm716 = vcmp.gt.f32.partialorder %v699, 0.0
        %vm717 = vcmp.gt.f32.partialorder %v648, 0.0
        %vm718 = vcmp.gt.f32.partialorder %v650, 0.0
        %vm719 = vcmp.gt.f32.partialorder %v701, 0.0
        %vm720 = vcmp.gt.f32.partialorder %v703, 0.0
        %v721 = vmul.f32 %v634, 0.01
        %v722 = vmul.f32 %v636, 0.01
        %v723 = vmul.f32 %v687, 0.01
        %v724 = vmul.f32 %v689, 0.01
        %v725 = vmul.f32 %v638, 0.01
        %v726 = vmul.f32 %v640, 0.01
        %v727 = vmul.f32 %v691, 0.01
        %v728 = vmul.f32 %v693, 0.01
        %v729 = vmul.f32 %v644, 0.01
        %v730 = vmul.f32 %v646, 0.01
        %v731 = vmul.f32 %v697, 0.01
        %v732 = vmul.f32 %v699, 0.01
        %v733 = vmul.f32 %v648, 0.01
        %v734 = vmul.f32 %v650, 0.01
        %v735 = vmul.f32 %v701, 0.01
        %v736 = vmul.f32 %v703, 0.01
        %v737 = vsel %vm705, %v634, %v721
        %v738 = vsel %vm706, %v636, %v722
        %v739 = vsel %vm707, %v687, %v723
        %v740 = vsel %vm708, %v689, %v724
        %v741 = vsel %vm709, %v638, %v725
        %v742 = vsel %vm710, %v640, %v726
        %v743 = vsel %vm711, %v691, %v727
        %v744 = vsel %vm712, %v693, %v728
        %v745 = vsel %vm713, %v644, %v729
        %v746 = vsel %vm714, %v646, %v730
        %v747 = vsel %vm715, %v697, %v731
        %v748 = vsel %vm716, %v699, %v732
        %v749 = vsel %vm717, %v648, %v733
        %v750 = vsel %vm718, %v650, %v734
        %v751 = vsel %vm719, %v701, %v735
        %v752 = vsel %vm720, %v703, %v736
        %v753 = vpack.c.bf16 %v741, %v737
        %v754 = vpack.c.bf16 %v742, %v738
        %v755 = vpack.c.bf16 %v743, %v739
        %v756 = vpack.c.bf16 %v744, %v740
        %v757 = vpack.c.bf16 %v749, %v745
        %v758 = vpack.c.bf16 %v750, %v746
        %v759 = vpack.c.bf16 %v751, %v747
        %v760 = vpack.c.bf16 %v752, %v748
        %v761 = vld [vmem:[#allocation5] sm:$0xf]
        %v762 = vld [vmem:[#allocation5 + $0x4] sm:$0xf]
        %v763 = vld [vmem:[#allocation5 + $0x8] sm:$0xf]
        %v764 = vld [vmem:[#allocation5 + $0xc] sm:$0xf]
        %v765 = vld [vmem:[#allocation5 + $0x10] sm:$0xf]
        %v766 = vld [vmem:[#allocation5 + $0x14] sm:$0xf]
        %v767 = vld [vmem:[#allocation5 + $0x18] sm:$0xf]
        %v768 = vld [vmem:[#allocation5 + $0x1c] sm:$0xf]
        %v769 = vld [vmem:[#allocation5 + $0x20] sm:$0xf]
        %v770 = vld [vmem:[#allocation5 + $0x24] sm:$0xf]
        %v771 = vld [vmem:[#allocation5 + $0x28] sm:$0xf]
        %v772 = vld [vmem:[#allocation5 + $0x2c] sm:$0xf]
        %v773 = vld [vmem:[#allocation5 + $0x30] sm:$0xf]
        %v774 = vld [vmem:[#allocation5 + $0x34] sm:$0xf]
        %v775 = vld [vmem:[#allocation5 + $0x38] sm:$0xf]
        %v776 = vld [vmem:[#allocation5 + $0x3c] sm:$0xf]
        %v777 = vld [vmem:[#allocation5 + $0x40] sm:$0xf]
        %v778 = vld [vmem:[#allocation5 + $0x44] sm:$0xf]
        %v779 = vld [vmem:[#allocation5 + $0x48] sm:$0xf]
        %v780 = vld [vmem:[#allocation5 + $0x4c] sm:$0xf]
        %v781 = vld [vmem:[#allocation5 + $0x50] sm:$0xf]
        %v782 = vld [vmem:[#allocation5 + $0x54] sm:$0xf]
        %v783 = vld [vmem:[#allocation5 + $0x58] sm:$0xf]
        %v784 = vld [vmem:[#allocation5 + $0x5c] sm:$0xf]
        %v785 = vld [vmem:[#allocation5 + $0x60] sm:$0xf]
        %v786 = vld [vmem:[#allocation5 + $0x64] sm:$0xf]
        %v787 = vld [vmem:[#allocation5 + $0x68] sm:$0xf]
        %v788 = vld [vmem:[#allocation5 + $0x6c] sm:$0xf]
        %v789 = vld [vmem:[#allocation5 + $0x70] sm:$0xf]
        %v790 = vld [vmem:[#allocation5 + $0x74] sm:$0xf]
        %v791 = vld [vmem:[#allocation5 + $0x78] sm:$0xf]
        %v792 = vld [vmem:[#allocation5 + $0x7c] sm:$0xf]
        %v793 = vld [vmem:[#allocation5 + $0x80] sm:$0xf]
        %v794 = vld [vmem:[#allocation5 + $0x84] sm:$0xf]
        %v795 = vld [vmem:[#allocation5 + $0x88] sm:$0xf]
        %v796 = vld [vmem:[#allocation5 + $0x8c] sm:$0xf]
        %v797 = vld [vmem:[#allocation5 + $0x90] sm:$0xf]
        %v798 = vld [vmem:[#allocation5 + $0x94] sm:$0xf]
        %v799 = vld [vmem:[#allocation5 + $0x98] sm:$0xf]
        %v800 = vld [vmem:[#allocation5 + $0x9c] sm:$0xf]
        %v801 = vld [vmem:[#allocation5 + $0xa0] sm:$0xf]
        %v802 = vld [vmem:[#allocation5 + $0xa4] sm:$0xf]
        %v803 = vld [vmem:[#allocation5 + $0xa8] sm:$0xf]
        %v804 = vld [vmem:[#allocation5 + $0xac] sm:$0xf]
        %v805 = vld [vmem:[#allocation5 + $0xb0] sm:$0xf]
        %v806 = vld [vmem:[#allocation5 + $0xb4] sm:$0xf]
        %v807 = vld [vmem:[#allocation5 + $0xb8] sm:$0xf]
        %v808 = vld [vmem:[#allocation5 + $0xbc] sm:$0xf]
        %v809 = vld [vmem:[#allocation5 + $0xc0] sm:$0xf]
        %v810 = vld [vmem:[#allocation5 + $0xc4] sm:$0xf]
        %v811 = vld [vmem:[#allocation5 + $0xc8] sm:$0xf]
        %v812 = vld [vmem:[#allocation5 + $0xcc] sm:$0xf]
        %v813 = vld [vmem:[#allocation5 + $0xd0] sm:$0xf]
        %v814 = vld [vmem:[#allocation5 + $0xd4] sm:$0xf]
        %v815 = vld [vmem:[#allocation5 + $0xd8] sm:$0xf]
        %v816 = vld [vmem:[#allocation5 + $0xdc] sm:$0xf]
        %v817 = vld [vmem:[#allocation5 + $0xe0] sm:$0xf]
        %v818 = vld [vmem:[#allocation5 + $0xe4] sm:$0xf]
        %v819 = vld [vmem:[#allocation5 + $0xe8] sm:$0xf]
        %v820 = vld [vmem:[#allocation5 + $0xec] sm:$0xf]
        %v821 = vld [vmem:[#allocation5 + $0xf0] sm:$0xf]
        %v822 = vld [vmem:[#allocation5 + $0xf4] sm:$0xf]
        %v823 = vld [vmem:[#allocation5 + $0xf8] sm:$0xf]
        %v824 = vld [vmem:[#allocation5 + $0xfc] sm:$0xf]
        %v825 = vld [vmem:[%s4] sm:$0x1]
        %v827 = vlaneseq
        %v828 = vshrl.u32 %v827, 7
        %v829 = vsub.s32 0, %v828
        %v830 = vrot.slane %v825, %v829
        %v896 = vunpack.c.l.b16 %v761
        %v897 = vunpack.c.l.b16 %v762
        %v898 = vunpack.c.l.b16 %v763
        %v899 = vunpack.c.l.b16 %v764
        %v900 = vunpack.c.l.b16 %v765
        %v901 = vunpack.c.l.b16 %v766
        %v902 = vunpack.c.l.b16 %v767
        %v903 = vunpack.c.l.b16 %v768
        %v904 = vunpack.c.l.b16 %v769
        %v905 = vunpack.c.l.b16 %v770
        %v906 = vunpack.c.l.b16 %v771
        %v907 = vunpack.c.l.b16 %v772
        %v908 = vunpack.c.l.b16 %v773
        %v909 = vunpack.c.l.b16 %v774
        %v910 = vunpack.c.l.b16 %v775
        %v911 = vunpack.c.l.b16 %v776
        %v912 = vunpack.c.l.b16 %v777
        %v913 = vunpack.c.l.b16 %v778
        %v914 = vunpack.c.l.b16 %v779
        %v915 = vunpack.c.l.b16 %v780
        %v916 = vunpack.c.l.b16 %v781
        %v917 = vunpack.c.l.b16 %v782
        %v918 = vunpack.c.l.b16 %v783
        %v919 = vunpack.c.l.b16 %v784
        %v920 = vunpack.c.l.b16 %v785
        %v921 = vunpack.c.l.b16 %v786
        %v922 = vunpack.c.l.b16 %v787
        %v923 = vunpack.c.l.b16 %v788
        %v924 = vunpack.c.l.b16 %v789
        %v925 = vunpack.c.l.b16 %v790
        %v926 = vunpack.c.l.b16 %v791
        %v927 = vunpack.c.l.b16 %v792
        %v928 = vunpack.c.l.b16 %v793
        %v929 = vunpack.c.l.b16 %v794
        %v930 = vunpack.c.l.b16 %v795
        %v931 = vunpack.c.l.b16 %v796
        %v932 = vunpack.c.l.b16 %v797
        %v933 = vunpack.c.l.b16 %v798
        %v934 = vunpack.c.l.b16 %v799
        %v935 = vunpack.c.l.b16 %v800
        %v936 = vunpack.c.l.b16 %v801
        %v937 = vunpack.c.l.b16 %v802
        %v938 = vunpack.c.l.b16 %v803
        %v939 = vunpack.c.l.b16 %v804
        %v940 = vunpack.c.l.b16 %v805
        %v941 = vunpack.c.l.b16 %v806
        %v942 = vunpack.c.l.b16 %v807
        %v943 = vunpack.c.l.b16 %v808
        %v944 = vunpack.c.l.b16 %v809
        %v945 = vunpack.c.l.b16 %v810
        %v946 = vunpack.c.l.b16 %v811
        %v947 = vunpack.c.l.b16 %v812
        %v948 = vunpack.c.l.b16 %v813
        %v949 = vunpack.c.l.b16 %v814
        %v950 = vunpack.c.l.b16 %v815
        %v951 = vunpack.c.l.b16 %v816
        %v952 = vunpack.c.l.b16 %v817
        %v953 = vunpack.c.l.b16 %v818
        %v954 = vunpack.c.l.b16 %v819
        %v955 = vunpack.c.l.b16 %v820
        %v956 = vunpack.c.l.b16 %v821
        %v957 = vunpack.c.l.b16 %v822
        %v958 = vunpack.c.l.b16 %v823
        %v959 = vunpack.c.l.b16 %v824
        %v960 = vpack.c.b16 %v897, %v896
        %v961 = vpack.c.b16 %v899, %v898
        %v962 = vpack.c.b16 %v901, %v900
        %v963 = vpack.c.b16 %v903, %v902
        %v964 = vpack.c.b16 %v905, %v904
        %v965 = vpack.c.b16 %v907, %v906
        %v966 = vpack.c.b16 %v909, %v908
        %v967 = vpack.c.b16 %v911, %v910
        %v968 = vpack.c.b16 %v913, %v912
        %v969 = vpack.c.b16 %v915, %v914
        %v970 = vpack.c.b16 %v917, %v916
        %v971 = vpack.c.b16 %v919, %v918
        %v972 = vpack.c.b16 %v921, %v920
        %v973 = vpack.c.b16 %v923, %v922
        %v974 = vpack.c.b16 %v925, %v924
        %v975 = vpack.c.b16 %v927, %v926
        %v976 = vpack.c.b16 %v929, %v928
        %v977 = vpack.c.b16 %v931, %v930
        %v978 = vpack.c.b16 %v933, %v932
        %v979 = vpack.c.b16 %v935, %v934
        %v980 = vpack.c.b16 %v937, %v936
        %v981 = vpack.c.b16 %v939, %v938
        %v982 = vpack.c.b16 %v941, %v940
        %v983 = vpack.c.b16 %v943, %v942
        %v984 = vpack.c.b16 %v945, %v944
        %v985 = vpack.c.b16 %v947, %v946
        %v986 = vpack.c.b16 %v949, %v948
        %v987 = vpack.c.b16 %v951, %v950
        %v988 = vpack.c.b16 %v953, %v952
        %v989 = vpack.c.b16 %v955, %v954
        %v990 = vpack.c.b16 %v957, %v956
        %v991 = vpack.c.b16 %v959, %v958
        %1024 = vmatprep.subr.bf16.mxu0 0
        %1025 = vmatpush1.bf16.msra.mxu0 %v960
        %1026 = vmatprep.subr.bf16.mxu0 0
        %1027 = vmatpush1.bf16.msra.mxu0 %v961
        %1028 = vmatprep.subr.bf16.mxu0 0
        %1029 = vmatpush1.bf16.msra.mxu0 %v962
        %1030 = vmatprep.subr.bf16.mxu0 0
        %1031 = vmatpush1.bf16.msra.mxu0 %v963
        %1032 = vmatprep.subr.bf16.mxu0 0
        %1033 = vmatpush1.bf16.msra.mxu0 %v964
        %1034 = vmatprep.subr.bf16.mxu0 0
        %1035 = vmatpush1.bf16.msra.mxu0 %v965
        %1036 = vmatprep.subr.bf16.mxu0 0
        %1037 = vmatpush1.bf16.msra.mxu0 %v966
        %1038 = vmatprep.subr.bf16.mxu0 0
        %1039 = vmatpush1.bf16.msra.mxu0 %v967
        %1040 = vmatprep.subr.bf16.mxu0 0
        %1041 = vmatpush1.bf16.msra.mxu0 %v968
        %1042 = vmatprep.subr.bf16.mxu0 0
        %1043 = vmatpush1.bf16.msra.mxu0 %v969
        %1044 = vmatprep.subr.bf16.mxu0 0
        %1045 = vmatpush1.bf16.msra.mxu0 %v970
        %1046 = vmatprep.subr.bf16.mxu0 0
        %1047 = vmatpush1.bf16.msra.mxu0 %v971
        %1048 = vmatprep.subr.bf16.mxu0 0
        %1049 = vmatpush1.bf16.msra.mxu0 %v972
        %1050 = vmatprep.subr.bf16.mxu0 0
        %1051 = vmatpush1.bf16.msra.mxu0 %v973
        %1052 = vmatprep.subr.bf16.mxu0 0
        %1053 = vmatpush1.bf16.msra.mxu0 %v974
        %1054 = vmatprep.subr.bf16.mxu0 0
        %1055 = vmatpush1.bf16.msra.mxu0 %v975
        %1056 = vmatprep.mubr.bf16.mxu0 %v754
        %1057 = vmatmul.mubr.bf16.gmra.mrb[0].mxu0 %v753
        %v1058 = vpop.f32.mrb[0].mxu0
        %v1059 = vadd.f32 %v830, %v1058
        %v1060 = vpop.f32.mrb[0].mxu0
        %v1061 = vpop.f32.mrb[0].mxu0
        %v1062 = vadd.f32 %v830, %v1061
        %v1063 = vpop.f32.mrb[0].mxu0
        %1064 = vmatprep.mubr.bf16.mxu0 %v758
        %1065 = vmatmul.mubr.bf16.gmra.mrb[0].mxu0 %v757
        %v1066 = vpop.f32.mrb[0].mxu0
        %v1067 = vadd.f32 %v830, %v1066
        %v1068 = vpop.f32.mrb[0].mxu0
        %v1069 = vpop.f32.mrb[0].mxu0
        %v1070 = vadd.f32 %v830, %v1069
        %v1071 = vpop.f32.mrb[0].mxu0
        %1072 = vdwg.mxu0
        %1073 = vmatprep.subr.bf16.mxu0 0
        %1074 = vmatpush1.bf16.msra.mxu0 %v976
        %1075 = vmatprep.subr.bf16.mxu0 0
        %1076 = vmatpush1.bf16.msra.mxu0 %v977
        %1077 = vmatprep.subr.bf16.mxu0 0
        %1078 = vmatpush1.bf16.msra.mxu0 %v978
        %1079 = vmatprep.subr.bf16.mxu0 0
        %1080 = vmatpush1.bf16.msra.mxu0 %v979
        %1081 = vmatprep.subr.bf16.mxu0 0
        %1082 = vmatpush1.bf16.msra.mxu0 %v980
        %1083 = vmatprep.subr.bf16.mxu0 0
        %1084 = vmatpush1.bf16.msra.mxu0 %v981
        %1085 = vmatprep.subr.bf16.mxu0 0
        %1086 = vmatpush1.bf16.msra.mxu0 %v982
        %1087 = vmatprep.subr.bf16.mxu0 0
        %1088 = vmatpush1.bf16.msra.mxu0 %v983
        %1089 = vmatprep.subr.bf16.mxu0 0
        %1090 = vmatpush1.bf16.msra.mxu0 %v984
        %1091 = vmatprep.subr.bf16.mxu0 0
        %1092 = vmatpush1.bf16.msra.mxu0 %v985
        %1093 = vmatprep.subr.bf16.mxu0 0
        %1094 = vmatpush1.bf16.msra.mxu0 %v986
        %1095 = vmatprep.subr.bf16.mxu0 0
        %1096 = vmatpush1.bf16.msra.mxu0 %v987
        %1097 = vmatprep.subr.bf16.mxu0 0
        %1098 = vmatpush1.bf16.msra.mxu0 %v988
        %1099 = vmatprep.subr.bf16.mxu0 0
        %1100 = vmatpush1.bf16.msra.mxu0 %v989
        %1101 = vmatprep.subr.bf16.mxu0 0
        %1102 = vmatpush1.bf16.msra.mxu0 %v990
        %1103 = vmatprep.subr.bf16.mxu0 0
        %1104 = vmatpush1.bf16.msra.mxu0 %v991
        %1105 = vmatprep.mubr.bf16.mxu0 %v756
        %1106 = vmatmul.mubr.bf16.gmra.mrb[0].mxu0 %v755
        %v1107 = vpop.f32.mrb[0].mxu0
        %v1108 = vadd.f32 %v1059, %v1107
        %v1109 = vpop.f32.mrb[0].mxu0
        %v1110 = vpop.f32.mrb[0].mxu0
        %v1111 = vadd.f32 %v1062, %v1110
        %v1112 = vpop.f32.mrb[0].mxu0
        %1113 = vmatprep.mubr.bf16.mxu0 %v760
        %1114 = vmatmul.mubr.bf16.gmra.mrb[0].mxu0 %v759
        %v1115 = vpop.f32.mrb[0].mxu0
        %v1116 = vadd.f32 %v1067, %v1115
        %v1117 = vpop.f32.mrb[0].mxu0
        %v1118 = vpop.f32.mrb[0].mxu0
        %v1119 = vadd.f32 %v1070, %v1118
        %v1120 = vpop.f32.mrb[0].mxu0
        %1121 = vdwg.mxu0
        %vm1122 = vcmp.gt.f32.partialorder %v1108, 0.0
        %vm1123 = vcmp.gt.f32.partialorder %v1111, 0.0
        %vm1124 = vcmp.gt.f32.partialorder %v1116, 0.0
        %vm1125 = vcmp.gt.f32.partialorder %v1119, 0.0
        %v1126 = vmul.f32 %v1108, 0.01
        %v1127 = vmul.f32 %v1111, 0.01
        %v1128 = vmul.f32 %v1116, 0.01
        %v1129 = vmul.f32 %v1119, 0.01
        %v1130 = vsel %vm1122, %v1108, %v1126
        %v1131 = vsel %vm1123, %v1111, %v1127
        %v1132 = vsel %vm1124, %v1116, %v1128
        %v1133 = vsel %vm1125, %v1119, %v1129
        %v1134 = vpack.c.bf16 %v1131, %v1130
        %v1135 = vpack.c.bf16 %v1133, %v1132
        %v1136 = vld [vmem:[%s5] sm:$0xf]
        %v1137 = vld [vmem:[%s5 + $0x4] sm:$0xf]
        %v1138 = vld [vmem:[%s5 + $0x8] sm:$0xf]
        %v1139 = vld [vmem:[%s5 + $0xc] sm:$0xf]
        %v1140 = vld [vmem:[%s5 + $0x10] sm:$0xf]
        %v1141 = vld [vmem:[%s5 + $0x14] sm:$0xf]
        %v1142 = vld [vmem:[%s5 + $0x18] sm:$0xf]
        %v1143 = vld [vmem:[%s5 + $0x1c] sm:$0xf]
        %v1144 = vld [vmem:[%s5 + $0x20] sm:$0xf]
        %v1145 = vld [vmem:[%s5 + $0x24] sm:$0xf]
        %v1146 = vld [vmem:[%s5 + $0x28] sm:$0xf]
        %v1147 = vld [vmem:[%s5 + $0x2c] sm:$0xf]
        %v1148 = vld [vmem:[%s5 + $0x30] sm:$0xf]
        %v1149 = vld [vmem:[%s5 + $0x34] sm:$0xf]
        %v1150 = vld [vmem:[%s5 + $0x38] sm:$0xf]
        %v1151 = vld [vmem:[%s5 + $0x3c] sm:$0xf]
        %v1152 = vld [vmem:[%s6] sm:$0x1]
        %v1154 = vlaneseq
        %v1155 = vshrl.u32 %v1154, 7
        %v1156 = vsub.s32 0, %v1155
        %v1157 = vrot.slane %v1152, %v1156
        %v1175 = vunpack.c.l.b16 %v1136
        %v1176 = vunpack.c.l.b16 %v1137
        %v1177 = vunpack.c.l.b16 %v1138
        %v1178 = vunpack.c.l.b16 %v1139
        %v1179 = vunpack.c.l.b16 %v1140
        %v1180 = vunpack.c.l.b16 %v1141
        %v1181 = vunpack.c.l.b16 %v1142
        %v1182 = vunpack.c.l.b16 %v1143
        %v1183 = vunpack.c.l.b16 %v1144
        %v1184 = vunpack.c.l.b16 %v1145
        %v1185 = vunpack.c.l.b16 %v1146
        %v1186 = vunpack.c.l.b16 %v1147
        %v1187 = vunpack.c.l.b16 %v1148
        %v1188 = vunpack.c.l.b16 %v1149
        %v1189 = vunpack.c.l.b16 %v1150
        %v1190 = vunpack.c.l.b16 %v1151
        %v1191 = vpack.c.b16 %v1176, %v1175
        %v1192 = vpack.c.b16 %v1178, %v1177
        %v1193 = vpack.c.b16 %v1180, %v1179
        %v1194 = vpack.c.b16 %v1182, %v1181
        %v1195 = vpack.c.b16 %v1184, %v1183
        %v1196 = vpack.c.b16 %v1186, %v1185
        %v1197 = vpack.c.b16 %v1188, %v1187
        %v1198 = vpack.c.b16 %v1190, %v1189
        %1207 = vmatprep.subr.bf16.mxu0 0
        %1208 = vmatpush1.bf16.msra.mxu0 %v1191
        %1209 = vmatprep.subr.bf16.mxu0 0
        %1210 = vmatpush1.bf16.msra.mxu0 %v1192
        %1211 = vmatprep.subr.bf16.mxu0 0
        %1212 = vmatpush1.bf16.msra.mxu0 %v1193
        %1213 = vmatprep.subr.bf16.mxu0 0
        %1214 = vmatpush1.bf16.msra.mxu0 %v1194
        %1215 = vmatprep.subr.bf16.mxu0 0
        %1216 = vmatpush1.bf16.msra.mxu0 %v1195
        %1217 = vmatprep.subr.bf16.mxu0 0
        %1218 = vmatpush1.bf16.msra.mxu0 %v1196
        %1219 = vmatprep.subr.bf16.mxu0 0
        %1220 = vmatpush1.bf16.msra.mxu0 %v1197
        %1221 = vmatprep.subr.bf16.mxu0 0
        %1222 = vmatpush1.bf16.msra.mxu0 %v1198
        %1223 = vmatprep.subr.bf16.mxu0 0
        %1224 = vmatpush1.bf16.msra.mxu0 0
        %1225 = vmatprep.subr.bf16.mxu0 0
        %1226 = vmatpush1.bf16.msra.mxu0 0
        %1227 = vmatprep.subr.bf16.mxu0 0
        %1228 = vmatpush1.bf16.msra.mxu0 0
        %1229 = vmatprep.subr.bf16.mxu0 0
        %1230 = vmatpush1.bf16.msra.mxu0 0
        %1231 = vmatprep.subr.bf16.mxu0 0
        %1232 = vmatpush1.bf16.msra.mxu0 0
        %1233 = vmatprep.subr.bf16.mxu0 0
        %1234 = vmatpush1.bf16.msra.mxu0 0
        %1235 = vmatprep.subr.bf16.mxu0 0
        %1236 = vmatpush1.bf16.msra.mxu0 0
        %1237 = vmatprep.subr.bf16.mxu0 0
        %1238 = vmatpush1.bf16.msra.mxu0 0
        %1239 = vmatprep.mubr.bf16.mxu0 0
        %1240 = vmatmul.mubr.bf16.gmra.mrb[0].mxu0 %v1134
        %v1241 = vpop.f32.mrb[0].mxu0
        %v1242 = vadd.f32 %v1157, %v1241
        %v1243 = vpop.f32.mrb[0].mxu0
        %v1244 = vpop.f32.mrb[0].mxu0
        %v1245 = vadd.f32 %v1157, %v1244
        %v1246 = vpop.f32.mrb[0].mxu0
        %1247 = vmatprep.mubr.bf16.mxu0 0
        %1248 = vmatmul.mubr.bf16.gmra.mrb[0].mxu0 %v1135
        %v1249 = vpop.f32.mrb[0].mxu0
        %v1250 = vadd.f32 %v1157, %v1249
        %v1251 = vpop.f32.mrb[0].mxu0
        %v1252 = vpop.f32.mrb[0].mxu0
        %v1253 = vadd.f32 %v1157, %v1252
        %v1254 = vpop.f32.mrb[0].mxu0
        %1255 = vdwg.mxu0
        %vm1256 = vcmp.gt.f32.partialorder %v1242, 0.0
        %vm1257 = vcmp.gt.f32.partialorder %v1245, 0.0
        %vm1258 = vcmp.gt.f32.partialorder %v1250, 0.0
        %vm1259 = vcmp.gt.f32.partialorder %v1253, 0.0
        %v1260 = vmul.f32 %v1242, 0.01
        %v1261 = vmul.f32 %v1245, 0.01
        %v1262 = vmul.f32 %v1250, 0.01
        %v1263 = vmul.f32 %v1253, 0.01
        %v1264 = vsel %vm1256, %v1242, %v1260
        %v1265 = vsel %vm1257, %v1245, %v1261
        %v1266 = vsel %vm1258, %v1250, %v1262
        %v1267 = vsel %vm1259, %v1253, %v1263
        %v1268 = vld [vmem:[%s7] sm:$0x1]
        %v1270 = vlaneseq
        %v1271 = vshrl.u32 %v1270, 7
        %v1272 = vsub.s32 0, %v1271
        %v1273 = vrot.slane %v1268, %v1272
        %v1275 = vmul.f32 %v1264, %v1273
        %v1276 = vmul.f32 %v1265, %v1273
        %v1277 = vmul.f32 %v1266, %v1273
        %v1278 = vmul.f32 %v1267, %v1273
        %vm1279 = vcmask 130048
        %v1280 = vsel %vm1279, %v1275, 0.0
        %1281 = vadd.xlane.f32.xlu0 %v1280
        %v1282 = vpop.xlane.xlu0 %1281
        %v1283 = vsel %vm1279, %v1276, 0.0
        %1284 = vadd.xlane.f32.xlu0 %v1283
        %v1285 = vpop.xlane.xlu0 %1284
        %v1286 = vsel %vm1279, %v1277, 0.0
        %1287 = vadd.xlane.f32.xlu0 %v1286
        %v1288 = vpop.xlane.xlu0 %1287
        %v1289 = vsel %vm1279, %v1278, 0.0
        %1290 = vadd.xlane.f32.xlu0 %v1289
        %v1291 = vpop.xlane.xlu0 %1290
        %v1292 = vld [vmem:[#allocation2] sm:$0x1]
        %v1294 = vlaneseq
        %v1295 = vshrl.u32 %v1294, 7
        %v1296 = vsub.s32 0, %v1295
        %v1297 = vrot.slane %v1292, %v1296
        %v1299 = vadd.f32 %v1282, %v1297
        %v1300 = vadd.f32 %v1285, %v1297
        %v1301 = vadd.f32 %v1288, %v1297
        %v1302 = vadd.f32 %v1291, %v1297
        %v1303 = vxor.u32 %v1299, 2147483648
        %v1304 = vxor.u32 %v1300, 2147483648
        %v1305 = vxor.u32 %v1301, 2147483648
        %v1306 = vxor.u32 %v1302, 2147483648
        %v1307 = vmul.f32 %v1303, 1.442695
        %v1308 = vpow.pop %v1307
        %v1309 = vmul.f32 %v1304, 1.442695
        %v1310 = vpow.pop %v1309
        %v1311 = vmul.f32 %v1305, 1.442695
        %v1312 = vpow.pop %v1311
        %v1313 = vmul.f32 %v1306, 1.442695
        %v1314 = vpow.pop %v1313
        %v1315 = vadd.f32 %v1308, 1.0
        %v1316 = vadd.f32 %v1310, 1.0
        %v1317 = vadd.f32 %v1312, 1.0
        %v1318 = vadd.f32 %v1314, 1.0
        %v1319 = vrcp.pop %v1315
        %v1320 = vmul.f32 1.0, %v1319
        %v1321 = vrcp.pop %v1316
        %v1322 = vmul.f32 1.0, %v1321
        %v1323 = vrcp.pop %v1317
        %v1324 = vmul.f32 1.0, %v1323
        %v1325 = vrcp.pop %v1318
        %v1326 = vmul.f32 1.0, %v1325
        %vm1327 = vcmask 7168
        %1328 = vst.msk [vmem:[%s366] sm:$0xff] %vm1327, %v1320
        %1329 = vst.msk [vmem:[%s366 + $0x8] sm:$0xff] %vm1327, %v1322
        %1330 = vst.msk [vmem:[%s366 + $0x10] sm:$0xff] %vm1327, %v1324
        %1331 = vst.msk [vmem:[%s366 + $0x18] sm:$0xff] %vm1327, %v1326
        %s1332 = smul.u32 4, %s24
        %p1333 = scmp.lt.s32.totalorder %s1332, 7
        %s1334 = scalar_select %p1333, %s1332, 7
        %s1335 = smul.addr %s1334, 8
        %s1336 = scalar_lea.vmem %s9, %s1335
        // Predicated region
        $region65: #{tpu_custom_call.1} parent=55 // pred_check
          %p1337 = pneg %p236
        $region66: #{tpu_custom_call.1} parent=55 // pred_check_branch
          %1339 = sbr.rel (%p1337) target = $region68
        $region67: #{tpu_custom_call.1} parent=55 // pred_region
          %s1340 = smul.u32 4, %s24
        $region68: #{tpu_custom_call.1} parent=55 // pred_fallthru
          _
      $region56: #{tpu_custom_call.1} parent=5 // pred_fallthru
        _
      %p1341 = scmp.le.s32.totalorder 2, %s19
      // Predicated region
      $region69: #{tpu_custom_call.1} parent=5 // pred_check
        %p1342 = pneg %p1341
      $region70: #{tpu_custom_call.1} parent=5 // pred_check_branch
        %1344 = sbr.rel (%p1342) target = $region72
      $region71: #{tpu_custom_call.1} parent=5 // pred_region
        %s1345 = ssub.s32 %s19, 2
        // Predicated region
        $region73: #{tpu_custom_call.1} parent=71 // pred_check
          %p1346 = pneg %p242
        $region74: #{tpu_custom_call.1} parent=71 // pred_check_branch
          %1348 = sbr.rel (%p1346) target = $region76
        $region75: #{tpu_custom_call.1} parent=71 // pred_region
          %s1349 = smul.u32 4, %s25
          %p1350 = scmp.lt.s32.totalorder %s1349, 7
          %s1351 = scalar_select %p1350, %s1349, 7
          %s1352 = smul.addr %s1351, 8
          %s1353 = scalar_lea.vmem %s9, %s1352
        $region76: #{tpu_custom_call.1} parent=71 // pred_fallthru
          _
      $region72: #{tpu_custom_call.1} parent=5 // pred_fallthru
        _
    $region6: #{tpu_custom_call.1} parent=1 // loop_footer
      %s23 = sadd.s32 1, %s19
    $region7: #{tpu_custom_call.1} parent=1 // loop_footer_branch
      %18 = sbr.rel target = $region3
    $region8: #{tpu_custom_call.1} parent=1 // loop_exit
      _
    %1354 = vsyncpa [#allocation4], 1
    %s1355 = scalar_lea.sflag [#allocation4], 1
    %1356 = vsyncpa %s1355, 1
    %1357 = vsyncpa [#allocation6], 1

</llo_original>
